<compile_context>
chip_gen: v5e
topology: v5e:2x2
jax: 0.10.0
libtpu: 0.0.40
codegen_flags: <defaults>
</compile_context>

<pallas_src>
import functools

import jax
import jax.numpy as jnp
from jax.experimental import pallas as pl
from jax.experimental.pallas import tpu as pltpu


def _reg1_kernel(x_ref, y_ref, out_ref, *, n_rows, block_rows, chan):
    """Emit per-block partial (numerator, mask-count) for the Reg1 loss.

    x_ref / y_ref : (block_rows, L) lane-dense slabs, L = T * C (flattened).
    out_ref       : (1, 2, 128) f32; sublane 0 = partial numerator,
                    sublane 1 = partial mask count (broadcast across lanes).
    """
    i = pl.program_id(0)

    x = x_ref[...]
    y = y_ref[...]

    # Temporal difference in the flattened layout:
    #   diff[k] = v[k] - v[k - C], valid only for lane index k >= C.
    # pltpu.roll follows jnp.roll semantics: roll(v, C)[k] == v[(k - C) % L],
    # so lanes k >= C hold exactly x[t] - x[t-1]; lanes [0, C) are masked off.
    dx = x - pltpu.roll(x, shift=chan, axis=1)
    dy = y - pltpu.roll(y, shift=chan, axis=1)

    lane = jax.lax.broadcasted_iota(jnp.int32, x.shape, 1)
    row = jax.lax.broadcasted_iota(jnp.int32, x.shape, 0)
    # Mask out the wrapped first C lanes and any padded rows of the last block.
    valid = (lane >= chan) & ((i * block_rows + row) < n_rows)

    pos = (dx >= 0) & valid                         # diff_x >= 0 (valid region)
    r = jnp.maximum(-dy, 0).astype(jnp.float32)     # relu(-diff_y)
    sq = jnp.where(pos, r * r, 0.0)

    num = jnp.sum(sq)                               # partial numerator
    # Per-block count stays well below 2**24 for MiB-sized blocks, so f32 is
    # exact here; cross-block summation happens in JAX outside the kernel.
    den = jnp.sum(pos.astype(jnp.float32))          # partial mask count

    sel = jax.lax.broadcasted_iota(jnp.int32, out_ref.shape, 1)
    out_ref[...] = jnp.where(sel == 0, num, den)


def reg1_loss(x, y, *, block_rows=None, target_block_bytes=2 * 1024 * 1024):
    """Returns {'PrecipSoilMoisture': scalar_loss} like the PyTorch module."""
    assert x.shape == y.shape and x.ndim == 3
    N, T, C = x.shape
    L = T * C
    itemsize = jnp.dtype(x.dtype).itemsize

    # Lane-dense layout: flatten (T, C) so the last dim maps onto the lanes.
    xf = x.reshape(N, L)
    yf = y.reshape(N, L)

    if block_rows is None:
        rows = max(1, int(target_block_bytes) // max(1, L * itemsize))
        if rows >= N:
            block_rows = N
        else:
            block_rows = min(N, max(8, (rows // 8) * 8))
    block_rows = int(block_rows)
    num_blocks = (N + block_rows - 1) // block_rows

    kernel = functools.partial(
        _reg1_kernel, n_rows=N, block_rows=block_rows, chan=C
    )

    partials = pl.pallas_call(
        kernel,
        out_shape=jax.ShapeDtypeStruct((num_blocks, 2, 128), jnp.float32),
        grid=(num_blocks,),
        in_specs=[
            pl.BlockSpec((block_rows, L), lambda i: (i, 0)),
            pl.BlockSpec((block_rows, L), lambda i: (i, 0)),
        ],
        out_specs=pl.BlockSpec((1, 2, 128), lambda i: (i, 0, 0)),
        compiler_params=pltpu.CompilerParams(
            dimension_semantics=("parallel",),
            vmem_limit_bytes=48 * 1024 * 1024,
        ),
        cost_estimate=pl.CostEstimate(
            flops=8 * N * L,
            transcendentals=0,
            bytes_accessed=2 * N * L * itemsize + num_blocks * 2 * 128 * 4,
        ),
    )(xf, yf)

    num_total = jnp.sum(partials[:, 0, 0])
    den_total = jnp.sum(partials[:, 1, 0])
    # Same behavior as PyTorch: if no element has diff_x >= 0, this is 0/0.
    loss = num_total / den_total
    return {"PrecipSoilMoisture": loss}


def _reg1_ref(x, y):
    diff_x = x[:, 1:, :] - x[:, :-1, :]
    diff_y = y[:, 1:, :] - y[:, :-1, :]
    mask = diff_x >= 0
    num = jnp.sum(jnp.where(mask, jnp.maximum(-diff_y, 0.0) ** 2, 0.0))
    den = jnp.sum(mask.astype(jnp.float32))
    return num / den


if __name__ == "__main__":
    # Case 1: small shape matching the module's (N, T, C) contract.
    kx, ky = jax.random.split(jax.random.PRNGKey(0))
    N, T, C = 2, 8, 4
    x = jax.random.normal(kx, (N, T, C), dtype=jnp.float32)
    y = jax.random.normal(ky, (N, T, C), dtype=jnp.float32)
    loss = jax.block_until_ready(reg1_loss(x, y)["PrecipSoilMoisture"])
    ref = _reg1_ref(x, y)
    assert jnp.allclose(loss, ref, rtol=1e-5, atol=1e-6), (loss, ref)

    # Case 2: multi-block parallel grid with a partial (masked) last block.
    kx2, ky2 = jax.random.split(jax.random.PRNGKey(1))
    N2, T2, C2 = 20, 8, 4
    x2 = jax.random.normal(kx2, (N2, T2, C2), dtype=jnp.float32)
    y2 = jax.random.normal(ky2, (N2, T2, C2), dtype=jnp.float32)
    loss2 = jax.block_until_ready(
        reg1_loss(x2, y2, block_rows=8)["PrecipSoilMoisture"]
    )
    ref2 = _reg1_ref(x2, y2)
    assert jnp.allclose(loss2, ref2, rtol=1e-5, atol=1e-6), (loss2, ref2)

    print("KERNEL_OK")
</pallas_src>

<mosaic_0001>
module attributes {stable_mosaic.version = 11 : i64} {
  func.func @_reg1_kernel(%arg0: i32, %arg1: memref<2x32xf32, #tpu.memory_space<vmem>>, %arg2: memref<2x32xf32, #tpu.memory_space<vmem>>, %arg3: memref<1x2x128xf32, #tpu.memory_space<vmem>>) attributes {dimension_semantics = [#tpu.dimension_semantics<parallel>], iteration_bounds = array<i64: 1>, scalar_prefetch = 0 : i64, scratch_operands = 0 : i64, tpu.core_type = #tpu.core_type<tc>, window_params = [{transform_indices = @transform_0, window_bounds = array<i64: 2, 32>}, {transform_indices = @transform_1, window_bounds = array<i64: 2, 32>}, {transform_indices = @transform_2, window_bounds = array<i64: 1, 2, 128>}]} {
    %c0 = arith.constant 0 : index
    %c0_0 = arith.constant 0 : index
    %0 = vector.load %arg1[%c0, %c0_0] : memref<2x32xf32, #tpu.memory_space<vmem>>, vector<2x32xf32>
    %c0_1 = arith.constant 0 : index
    %c0_2 = arith.constant 0 : index
    %1 = vector.load %arg2[%c0_1, %c0_2] : memref<2x32xf32, #tpu.memory_space<vmem>>, vector<2x32xf32>
    %c4_i32 = arith.constant 4 : i32
    %2 = tpu.dynamic_rotate %0 by %c4_i32 dim 1 : vector<2x32xf32>, i32 -> vector<2x32xf32>
    %3 = arith.subf %0, %2 : vector<2x32xf32>
    %c4_i32_3 = arith.constant 4 : i32
    %4 = tpu.dynamic_rotate %1 by %c4_i32_3 dim 1 : vector<2x32xf32>, i32 -> vector<2x32xf32>
    %5 = arith.subf %1, %4 : vector<2x32xf32>
    %6 = tpu.iota {dimensions = array<i32: 1>} : vector<2x32xi32>
    %7 = tpu.iota {dimensions = array<i32: 0>} : vector<2x32xi32>
    %c4_i32_4 = arith.constant 4 : i32
    %8 = vector.broadcast %c4_i32_4 : i32 to vector<2x32xi32>
    %9 = arith.cmpi sge, %6, %8 : vector<2x32xi32>
    %c2_i32 = arith.constant 2 : i32
    %10 = arith.muli %arg0, %c2_i32 : i32
    %11 = vector.broadcast %10 : i32 to vector<2x32xi32>
    %12 = arith.addi %11, %7 : vector<2x32xi32>
    %c2_i32_5 = arith.constant 2 : i32
    %13 = vector.broadcast %c2_i32_5 : i32 to vector<2x32xi32>
    %14 = arith.cmpi slt, %12, %13 : vector<2x32xi32>
    %15 = arith.andi %9, %14 : vector<2x32xi1>
    %cst = arith.constant 0.000000e+00 : f32
    %16 = vector.broadcast %cst : f32 to vector<2x32xf32>
    %17 = arith.cmpf oge, %3, %16 : vector<2x32xf32>
    %18 = arith.andi %17, %15 : vector<2x32xi1>
    %cst_6 = arith.constant 0.000000e+00 : f32
    %19 = vector.broadcast %cst_6 : f32 to vector<2x32xf32>
    %20 = arith.subf %19, %5 : vector<2x32xf32>
    %cst_7 = arith.constant 0.000000e+00 : f32
    %21 = vector.broadcast %cst_7 : f32 to vector<2x32xf32>
    %22 = arith.maximumf %20, %21 : vector<2x32xf32>
    %23 = arith.mulf %22, %22 : vector<2x32xf32>
    %cst_8 = arith.constant 0.000000e+00 : f32
    %24 = vector.broadcast %cst_8 : f32 to vector<2x32xf32>
    %25 = arith.select %18, %23, %24 : vector<2x32xi1>, vector<2x32xf32>
    %26 = vector.shape_cast %25 : vector<2x32xf32> to vector<1x2x32xf32>
    %cst_9 = arith.constant dense<0.000000e+00> : vector<1xf32>
    %27 = vector.multi_reduction <add>, %26, %cst_9 [1, 2] : vector<1x2x32xf32> to vector<1xf32>
    %28 = vector.shape_cast %27 : vector<1xf32> to vector<1x1x1xf32>
    %29 = vector.extract %28[0, 0, 0] : f32 from vector<1x1x1xf32>
    %30 = arith.extui %18 : vector<2x32xi1> to vector<2x32xi32>
    %31 = arith.sitofp %30 : vector<2x32xi32> to vector<2x32xf32>
    %32 = vector.shape_cast %31 : vector<2x32xf32> to vector<1x2x32xf32>
    %cst_10 = arith.constant dense<0.000000e+00> : vector<1xf32>
    %33 = vector.multi_reduction <add>, %32, %cst_10 [1, 2] : vector<1x2x32xf32> to vector<1xf32>
    %34 = vector.shape_cast %33 : vector<1xf32> to vector<1x1x1xf32>
    %35 = vector.extract %34[0, 0, 0] : f32 from vector<1x1x1xf32>
    %36 = tpu.iota {dimensions = array<i32: 1>} : vector<1x2x128xi32>
    %c0_i32 = arith.constant 0 : i32
    %37 = vector.broadcast %c0_i32 : i32 to vector<1x2x128xi32>
    %38 = arith.cmpi eq, %36, %37 : vector<1x2x128xi32>
    %39 = vector.broadcast %29 : f32 to vector<1x2x128xf32>
    %40 = vector.broadcast %35 : f32 to vector<1x2x128xf32>
    %41 = arith.select %38, %39, %40 : vector<1x2x128xi1>, vector<1x2x128xf32>
    %c0_11 = arith.constant 0 : index
    %c0_12 = arith.constant 0 : index
    %c0_13 = arith.constant 0 : index
    %42 = vector.load %arg3[%c0_11, %c0_12, %c0_13] : memref<1x2x128xf32, #tpu.memory_space<vmem>>, vector<1x2x128xf32>
    tpu.vector_store %arg3[%c0_11, %c0_12, %c0_13], %41 {strides = array<i32>} : memref<1x2x128xf32, #tpu.memory_space<vmem>>, vector<1x2x128xf32>,
    return
  }
  func.func @transform_0(%arg0: i32) -> (i32, i32) {
    %c0_i32 = arith.constant 0 : i32
    %c0_i32_0 = arith.constant 0 : i32
    return %arg0, %c0_i32 : i32, i32
  }
  func.func @transform_1(%arg0: i32) -> (i32, i32) {
    %c0_i32 = arith.constant 0 : i32
    %c0_i32_0 = arith.constant 0 : i32
    return %arg0, %c0_i32 : i32, i32
  }
  func.func @transform_2(%arg0: i32) -> (i32, i32, i32) {
    %c0_i32 = arith.constant 0 : i32
    %c0_i32_0 = arith.constant 0 : i32
    %c0_i32_1 = arith.constant 0 : i32
    return %arg0, %c0_i32, %c0_i32_0 : i32, i32, i32
  }
}

</mosaic_0001>

<llo_original>
// kernel: tpu_custom_call.1
$region0: #{tpu_custom_call.1}
  #allocation0 [shape = 'u32[]', space=smem, size = 0x4, offset = 0x4, fixed_abs, tag = 'smem constant byte address 0x4 - core index']
  #allocation1 [shape = 'u32[72,128]{1,0:T(1,128)}', space=vmem, size = 0x9000, scoped, tag = 'internal scratch']
  %s0 = inlined_call_operand.hbm [shape: f32[2,32], index: 0, kind: input, shape index: {}]
  %s1 = inlined_call_operand.hbm [shape: f32[2,32], index: 1, kind: input, shape index: {}]
  %s2 = inlined_call_operand.hbm [shape: f32[1,2,128], index: 2, kind: output, shape index: {}]
  %s3 = sld [smem:[#allocation0]]
  $region26: #{tpu_custom_call.1} parent=0
    _
  %s5 = ssub.s32 1, %s3
  %s6 = scalar_select 0, %s5, %s3
  $region1: #{tpu_custom_call.1} parent=0
    #allocation2 [shape = 'u8[1024]{0}', space=vmem, size = 0x400, scoped, tag = 'input window, operand 0, single buffered']
    #allocation3 [shape = 's32[1]{0}', space=sflag, size = 0x4, scoped, tag = 'scoped memory for tpu_custom_call.1']
    #allocation4 [shape = 's32[1]{0}', space=sflag, size = 0x4, scoped, tag = 'scoped memory for tpu_custom_call.1']
    #allocation5 [shape = 'u8[1024]{0}', space=vmem, size = 0x400, scoped, tag = 'input window, operand 1, single buffered']
    #allocation6 [shape = 's32[1]{0}', space=sflag, size = 0x4, scoped, tag = 'scoped memory for tpu_custom_call.1']
    #allocation7 [shape = 'u8[1024]{0}', space=vmem, size = 0x400, scoped, tag = 'output window, operand 0, single buffered']
    %7 = vsyncpa [#allocation3], 0
    %8 = vsyncpa [#allocation6], 0
    %9 = vsyncpa [#allocation4], 0
    // Predicated region
    $region2: #{tpu_custom_call.1} parent=1 // pred_check
      _
    $region3: #{tpu_custom_call.1} parent=1 // pred_check_branch
      %11 = sbr.rel (0) target = $region5
    $region4: #{tpu_custom_call.1} parent=1 // pred_region
      %13 = vsyncadd [#allocation3], 0
      %s15 = sshll.u32 %s0, 4
      %s16 = int_to_ptr.hbm [resolvable:$true] %s15
      %s17 = sshll.u32 [#allocation2], 4
      %s18 = int_to_ptr.vmem [resolvable:$true] %s17
      %20 = dma.hbm_to_vmem [thread:$0]  %s16, 32, %s18, [#allocation3]
    $region5: #{tpu_custom_call.1} parent=1 // pred_fallthru
      _
    // Predicated region
    $region6: #{tpu_custom_call.1} parent=1 // pred_check
      _
    $region7: #{tpu_custom_call.1} parent=1 // pred_check_branch
      %22 = sbr.rel (0) target = $region9
    $region8: #{tpu_custom_call.1} parent=1 // pred_region
      %24 = vsyncadd [#allocation6], 0
      %s26 = sshll.u32 %s1, 4
      %s27 = int_to_ptr.hbm [resolvable:$true] %s26
      %s28 = sshll.u32 [#allocation5], 4
      %s29 = int_to_ptr.vmem [resolvable:$true] %s28
      %31 = dma.hbm_to_vmem [thread:$0]  %s27, 32, %s29, [#allocation6]
    $region9: #{tpu_custom_call.1} parent=1 // pred_fallthru
      _
    // Predicated region
    $region10: #{tpu_custom_call.1} parent=1 // pred_check
      _
    $region11: #{tpu_custom_call.1} parent=1 // pred_check_branch
      %33 = sbr.rel (0) target = $region13
    $region12: #{tpu_custom_call.1} parent=1 // pred_region
      %35 = dma.done [#allocation3], 32
    $region13: #{tpu_custom_call.1} parent=1 // pred_fallthru
      _
    // Predicated region
    $region14: #{tpu_custom_call.1} parent=1 // pred_check
      _
    $region15: #{tpu_custom_call.1} parent=1 // pred_check_branch
      %37 = sbr.rel (0) target = $region17
    $region16: #{tpu_custom_call.1} parent=1 // pred_region
      %39 = dma.done [#allocation6], 32
    $region17: #{tpu_custom_call.1} parent=1 // pred_fallthru
      _
    %v40 = vld [vmem:[#allocation2] sm:$0x3]
    %v41 = vld [vmem:[#allocation5] sm:$0x3]
    %vm42 = vcmask 1047808
    %43 = vrot.lane.b32.xlu0 %v40, 32
    %v44 = vpop.permute.xlu0 %43
    %v45 = vsel %vm42, %v44, %v40
    %46 = vrot.lane.b32.xlu0 %v45, 32
    %v47 = vpop.permute.xlu0 %46
    %v48 = vsel %vm42, %v47, %v40
    %50 = vrot.lane.b32.xlu0 %v48, 100
    %v51 = vpop.permute.xlu0 %50
    %v53 = vsub.f32 %v40, %v51
    %54 = vrot.lane.b32.xlu0 %v41, 32
    %v55 = vpop.permute.xlu0 %54
    %v56 = vsel %vm42, %v55, %v41
    %57 = vrot.lane.b32.xlu0 %v56, 32
    %v58 = vpop.permute.xlu0 %57
    %v59 = vsel %vm42, %v58, %v41
    %61 = vrot.lane.b32.xlu0 %v59, 100
    %v62 = vpop.permute.xlu0 %61
    %v64 = vsub.f32 %v41, %v62
    %v65 = vlaneseq
    %v66 = vand.u32 %v65, 127
    %v67 = vlaneseq
    %v68 = vshrl.u32 %v67, 7
    %vm69 = vcmp.ge.s32.totalorder %v66, 4
    %s70 = smul.u32 0, 2
    %v71 = vstv %s70
    %v72 = vadd.s32 %v71, %v68
    %vm73 = vcmp.lt.s32.totalorder %v72, 2
    %vm74 = vmand %vm69, %vm73
    %vm75 = vcmp.ge.f32.partialorder %v53, 0.0
    %vm76 = vmand %vm75, %vm74
    %v77 = vsub.f32 0.0, %v64
    %v78 = vmax.f32 %v77, 0.0
    %v79 = vmul.f32 %v78, %v78
    %v80 = vsel %vm76, %v79, 0.0
    %vm81 = vcmask 254976
    %v82 = vsel %vm81, %v80, 0.0
    %83 = vadd.xlane.f32.xlu0 %v82
    %v84 = vpop.xlane.xlu0 %83
    %v85 = vrot.slane %v84, 4
    %v86 = vadd.f32 %v84, %v85
    %v87 = vrot.slane %v86, 2
    %v88 = vadd.f32 %v86, %v87
    %v89 = vrot.slane %v88, 1
    %v90 = vadd.f32 %v88, %v89
    %s91 = vtos %v90
    %v92 = vsel %vm76, 1, 0
    %v93 = vcvt.s32.f32 %v92
    %v94 = vsel %vm81, %v93, 0.0
    %95 = vadd.xlane.f32.xlu0 %v94
    %v96 = vpop.xlane.xlu0 %95
    %v97 = vrot.slane %v96, 4
    %v98 = vadd.f32 %v96, %v97
    %v99 = vrot.slane %v98, 2
    %v100 = vadd.f32 %v98, %v99
    %v101 = vrot.slane %v100, 1
    %v102 = vadd.f32 %v100, %v101
    %s103 = vtos %v102
    %vm104 = vcmp.eq.s32.totalorder %v68, 0
    %v105 = vstv %s91
    %v106 = vstv %s103
    %v107 = vsel %vm104, %v105, %v106
    %108 = vst [vmem:[#allocation7] sm:$0x3] %v107
    // Predicated region
    $region18: #{tpu_custom_call.1} parent=1 // pred_check
      _
    $region19: #{tpu_custom_call.1} parent=1 // pred_check_branch
      %110 = sbr.rel (0) target = $region21
    $region20: #{tpu_custom_call.1} parent=1 // pred_region
      %112 = vsyncadd [#allocation4], 0
      %s114 = sshll.u32 [#allocation7], 4
      %s115 = int_to_ptr.vmem [resolvable:$true] %s114
      %s116 = sshll.u32 %s2, 4
      %s117 = int_to_ptr.hbm [resolvable:$true] %s116
      %119 = dma.vmem_to_hbm [thread:$0]  %s115, 32, %s117, [#allocation4]
    $region21: #{tpu_custom_call.1} parent=1 // pred_fallthru
      _
    // Predicated region
    $region22: #{tpu_custom_call.1} parent=1 // pred_check
      _
    $region23: #{tpu_custom_call.1} parent=1 // pred_check_branch
      %121 = sbr.rel (0) target = $region25
    $region24: #{tpu_custom_call.1} parent=1 // pred_region
      %123 = dma.done [#allocation4], 32
    $region25: #{tpu_custom_call.1} parent=1 // pred_fallthru
      _
    %124 = vsyncpa [#allocation3], 1
    %125 = vsyncpa [#allocation6], 1
    %126 = vsyncpa [#allocation4], 1

</llo_original>
